<compile_context>
chip_gen: v7x
topology: tpu7x:2x2x1
jax: 0.10.0
libtpu: 0.0.40
codegen_flags: <defaults>
</compile_context>

<pallas_src>
import functools

import jax
import jax.numpy as jnp
from jax.experimental import pallas as pl
from jax.experimental.pallas import tpu as pltpu


def predictor_kernel(x3_ref, wfused_ref, sel_ref, wh_ref, bh_ref, o_ref):
    # x3_ref    : (R, 3L+3)  R = (batches in this step) * seq_len, time-major
    #                        per batch; last 3 lanes are bias-indicator lanes.
    # wfused_ref: (3L+3, H)  fused foot+conv taps (+ bias rows)
    # sel_ref   : (BG, R)    per-batch mean-pool selection matrix (constant)
    # wh_ref    : (H, 128)   head weight, zero-padded to 128 output lanes
    # bh_ref    : (1, 128)   head bias, zero-padded
    # o_ref     : (BG, 128)  lane-dense output block
    h1 = jnp.maximum(
        jnp.dot(x3_ref[...], wfused_ref[...],
                preferred_element_type=jnp.float32), 0.0)             # (R, H)
    pooled = jnp.dot(sel_ref[...], h1,
                     preferred_element_type=jnp.float32)              # (BG, H)
    o_ref[...] = jnp.dot(pooled, wh_ref[...],
                         preferred_element_type=jnp.float32) + bh_ref[...]


def _default_batch_groups():
    # v7x has 2 TensorCores per chip; v5e/v6e are single-TC (grid>1 is a
    # serial loop with ~0.35us fixed overhead per step there).
    try:
        kind = jax.devices()[0].device_kind.lower()
        if "v7" in kind:
            return 2
    except Exception:
        pass
    return 1


def predictor_forward(x_ncl, wf, bf, wb, bb, wh, bh, *, batch_groups=None):
    """x_ncl: (B, num_lead, seq_len) float32 -> (B, num_classes)."""
    B, L, T = x_ncl.shape
    H = wf.shape[1]
    C = wh.shape[1]
    G = _default_batch_groups() if batch_groups is None else batch_groups
    if B % G != 0:
        G = 1
    BG = B // G
    R = BG * T
    # Output block (BG, 128): sublane dim must be a multiple of 8 or full B.
    assert (BG % 8 == 0) or (BG == B), \
        "per-step batch count must be a multiple of 8 (or the full batch)"

    f32 = jnp.float32
    x_ncl = x_ncl.astype(f32)

    # ---- algebraic fold of foot (1x1 conv) into the 3 backbone taps ----
    # h0 = x @ wf + bf ;   conv(k=3, pad=1):
    #   h1[t] = h0[t-1] @ wb[0] + h0[t] @ wb[1] + h0[t+1] @ wb[2] + bb
    # with zero conv padding (h0[-1] = h0[T] = 0, not foot(0)).
    w_tap = jnp.einsum('lh,khg->klg', wf, wb)            # (3, L, H) = wf @ wb[k]
    bias_tap = jnp.einsum('h,khg->kg', bf[0], wb)        # (3, H)    = bf @ wb[k]
    wfused = jnp.concatenate(
        [w_tap[0], w_tap[1], w_tap[2],
         bias_tap[0:1], (bias_tap[1] + bb[0])[None, :], bias_tap[2:3]],
        axis=0).astype(f32)                              # (3L+3, H)

    # ---- shifted + augmented input, built once in the wrapper (XLA) ----
    # Row order is batch-major then time; indicator lanes zero the tap-bias
    # contributions exactly where the conv's zero padding applies.
    xt = jnp.transpose(x_ncl, (0, 2, 1))                 # (B, T, L)
    zero = jnp.zeros_like(xt[:, :1, :])
    x_prev = jnp.concatenate([zero, xt[:, :-1, :]], axis=1)
    x_next = jnp.concatenate([xt[:, 1:, :], zero], axis=1)
    t = jnp.arange(T)
    prev_ok = jnp.broadcast_to((t > 0).astype(f32)[None, :, None], (B, T, 1))
    next_ok = jnp.broadcast_to((t < T - 1).astype(f32)[None, :, None], (B, T, 1))
    ones = jnp.ones((B, T, 1), f32)
    x3 = jnp.concatenate([x_prev, xt, x_next, prev_ok, ones, next_ok], axis=-1)
    x3 = x3.reshape(B * T, 3 * L + 3)                    # (B*T, 3L+3)

    # ---- hoisted mean-pool selection matrix (same for every grid step) ----
    b_idx = jnp.arange(BG)[:, None]
    r_idx = jnp.arange(R)[None, :]
    sel = jnp.where(r_idx // T == b_idx, 1.0 / T, 0.0).astype(f32)   # (BG, R)

    # ---- lane-dense head: pad to 128 output lanes ----
    C_PAD = 128
    wh_pad = jnp.zeros((H, C_PAD), f32).at[:, :C].set(wh)
    bh_pad = jnp.zeros((1, C_PAD), f32).at[:, :C].set(bh)

    out = pl.pallas_call(
        predictor_kernel,
        out_shape=jax.ShapeDtypeStruct((B, C_PAD), f32),
        grid_spec=pltpu.PrefetchScalarGridSpec(
            num_scalar_prefetch=0,
            grid=(G,),
            in_specs=[
                pl.BlockSpec((R, 3 * L + 3), lambda g: (g, 0)),  # folded input
                pl.BlockSpec((3 * L + 3, H), lambda g: (0, 0)),  # fused weight
                pl.BlockSpec((BG, R),        lambda g: (0, 0)),  # pool matrix
                pl.BlockSpec((H, C_PAD),     lambda g: (0, 0)),  # head weight
                pl.BlockSpec((1, C_PAD),     lambda g: (0, 0)),  # head bias
            ],
            out_specs=pl.BlockSpec((BG, C_PAD), lambda g: (g, 0)),
        ),
        compiler_params=pltpu.CompilerParams(
            dimension_semantics=("parallel",)),
    )(x3, wfused, sel, wh_pad, bh_pad)

    return out[:, :C]


def reference_forward(x_ncl, wf, bf, wb, bb, wh, bh):
    """Pure-JAX reference matching the PyTorch semantics (f32-accurate)."""
    hp = jax.lax.Precision.HIGHEST
    x = jnp.transpose(x_ncl, (0, 2, 1))                              # (B, T, L)
    h0 = jnp.einsum('btl,lh->bth', x, wf, precision=hp) + bf         # foot
    pad = jnp.zeros_like(h0[:, :1, :])
    h_prev = jnp.concatenate([pad, h0[:, :-1, :]], axis=1)
    h_next = jnp.concatenate([h0[:, 1:, :], pad], axis=1)
    h1 = (jnp.einsum('bth,hg->btg', h_prev, wb[0], precision=hp)
          + jnp.einsum('bth,hg->btg', h0,     wb[1], precision=hp)
          + jnp.einsum('bth,hg->btg', h_next, wb[2], precision=hp) + bb)
    h1 = jnp.maximum(h1, 0.0)
    pooled = jnp.mean(h1, axis=1)                                    # (B, H)
    return jnp.dot(pooled, wh, precision=hp) + bh[0]


if __name__ == "__main__":
    # batch, num_lead, seq_len / hidden channels, num_classes
    B, L, T = 16, 4, 16
    H, C = 32, 8

    key = jax.random.PRNGKey(0)
    kx, k1, k2, k3, k4, k5, k6 = jax.random.split(key, 7)

    x = jax.random.normal(kx, (B, L, T), dtype=jnp.float32)

    # deterministic synthetic parameters (in x out layouts)
    wf = jax.random.normal(k1, (L, H), dtype=jnp.float32) * 0.1
    bf = jax.random.normal(k2, (1, H), dtype=jnp.float32) * 0.1
    wb = jax.random.normal(k3, (3, H, H), dtype=jnp.float32) * 0.1
    bb = jax.random.normal(k4, (1, H), dtype=jnp.float32) * 0.1
    wh = jax.random.normal(k5, (H, C), dtype=jnp.float32) * 0.1
    bh = jax.random.normal(k6, (1, C), dtype=jnp.float32) * 0.1

    out = predictor_forward(x, wf, bf, wb, bb, wh, bh)
    out = jax.block_until_ready(out)

    ref = reference_forward(x, wf, bf, wb, bb, wh, bh)
    assert out.shape == (B, C)
    assert jnp.allclose(out, ref, atol=1e-3, rtol=1e-3), "mismatch vs reference"

    print("KERNEL_OK")
</pallas_src>

<mosaic_0001>
module attributes {stable_mosaic.version = 11 : i64} {
  func.func @predictor_kernel(%arg0: i32, %arg1: memref<256x15xf32, #tpu.memory_space<vmem>>, %arg2: memref<15x32xf32, #tpu.memory_space<vmem>>, %arg3: memref<16x256xf32, #tpu.memory_space<vmem>>, %arg4: memref<32x128xf32, #tpu.memory_space<vmem>>, %arg5: memref<1x128xf32, #tpu.memory_space<vmem>>, %arg6: memref<16x128xf32, #tpu.memory_space<vmem>>) attributes {dimension_semantics = [#tpu.dimension_semantics<parallel>], iteration_bounds = array<i64: 1>, scalar_prefetch = 0 : i64, scratch_operands = 0 : i64, tpu.core_type = #tpu.core_type<tc>, window_params = [{transform_indices = @transform_0, window_bounds = array<i64: 256, 15>}, {pipeline_mode = #tpu.pipeline_mode<synchronous>, transform_indices = @transform_1, window_bounds = array<i64: 15, 32>}, {pipeline_mode = #tpu.pipeline_mode<synchronous>, transform_indices = @transform_2, window_bounds = array<i64: 16, 256>}, {pipeline_mode = #tpu.pipeline_mode<synchronous>, transform_indices = @transform_3, window_bounds = array<i64: 32, 128>}, {pipeline_mode = #tpu.pipeline_mode<synchronous>, transform_indices = @transform_4, window_bounds = array<i64: 1, 128>}, {transform_indices = @transform_5, window_bounds = array<i64: 16, 128>}]} {
    %c0 = arith.constant 0 : index
    %c0_0 = arith.constant 0 : index
    %0 = vector.load %arg1[%c0, %c0_0] : memref<256x15xf32, #tpu.memory_space<vmem>>, vector<256x15xf32>
    %c0_1 = arith.constant 0 : index
    %c0_2 = arith.constant 0 : index
    %1 = vector.load %arg2[%c0_1, %c0_2] : memref<15x32xf32, #tpu.memory_space<vmem>>, vector<15x32xf32>
    %cst = arith.constant dense<0.000000e+00> : vector<256x32xf32>
    %2 = tpu.matmul %0, %1, %cst {dimension_numbers = #tpu.dot_dimension_numbers<[1], [0], [0], [1], [0, 0, 1, 1], [], []>} : vector<256x15xf32>, vector<15x32xf32>, vector<256x32xf32> -> vector<256x32xf32>
    %cst_3 = arith.constant 0.000000e+00 : f32
    %3 = vector.broadcast %cst_3 : f32 to vector<256x32xf32>
    %4 = arith.maximumf %2, %3 : vector<256x32xf32>
    %c0_4 = arith.constant 0 : index
    %c0_5 = arith.constant 0 : index
    %5 = vector.load %arg3[%c0_4, %c0_5] : memref<16x256xf32, #tpu.memory_space<vmem>>, vector<16x256xf32>
    %cst_6 = arith.constant dense<0.000000e+00> : vector<16x32xf32>
    %6 = tpu.matmul %5, %4, %cst_6 {dimension_numbers = #tpu.dot_dimension_numbers<[1], [0], [0], [1], [0, 0, 1, 1], [], []>} : vector<16x256xf32>, vector<256x32xf32>, vector<16x32xf32> -> vector<16x32xf32>
    %c0_7 = arith.constant 0 : index
    %c0_8 = arith.constant 0 : index
    %7 = vector.load %arg4[%c0_7, %c0_8] : memref<32x128xf32, #tpu.memory_space<vmem>>, vector<32x128xf32>
    %cst_9 = arith.constant dense<0.000000e+00> : vector<16x128xf32>
    %8 = tpu.matmul %6, %7, %cst_9 {dimension_numbers = #tpu.dot_dimension_numbers<[1], [0], [0], [1], [0, 0, 1, 1], [], []>} : vector<16x32xf32>, vector<32x128xf32>, vector<16x128xf32> -> vector<16x128xf32>
    %c0_10 = arith.constant 0 : index
    %c0_11 = arith.constant 0 : index
    %9 = vector.load %arg5[%c0_10, %c0_11] : memref<1x128xf32, #tpu.memory_space<vmem>>, vector<1x128xf32>
    %10 = vector.broadcast %9 : vector<1x128xf32> to vector<16x128xf32>
    %11 = arith.addf %8, %10 : vector<16x128xf32>
    %c0_12 = arith.constant 0 : index
    %c0_13 = arith.constant 0 : index
    %12 = vector.load %arg6[%c0_12, %c0_13] : memref<16x128xf32, #tpu.memory_space<vmem>>, vector<16x128xf32>
    tpu.vector_store %arg6[%c0_12, %c0_13], %11 {strides = array<i32>} : memref<16x128xf32, #tpu.memory_space<vmem>>, vector<16x128xf32>,
    return
  }
  func.func @transform_0(%arg0: i32) -> (i32, i32) {
    %c0_i32 = arith.constant 0 : i32
    %c0_i32_0 = arith.constant 0 : i32
    return %arg0, %c0_i32 : i32, i32
  }
  func.func @transform_1(%arg0: i32) -> (i32, i32) {
    %c0_i32 = arith.constant 0 : i32
    %c0_i32_0 = arith.constant 0 : i32
    %c0_i32_1 = arith.constant 0 : i32
    return %c0_i32, %c0_i32_0 : i32, i32
  }
  func.func @transform_2(%arg0: i32) -> (i32, i32) {
    %c0_i32 = arith.constant 0 : i32
    %c0_i32_0 = arith.constant 0 : i32
    %c0_i32_1 = arith.constant 0 : i32
    return %c0_i32, %c0_i32_0 : i32, i32
  }
  func.func @transform_3(%arg0: i32) -> (i32, i32) {
    %c0_i32 = arith.constant 0 : i32
    %c0_i32_0 = arith.constant 0 : i32
    %c0_i32_1 = arith.constant 0 : i32
    return %c0_i32, %c0_i32_0 : i32, i32
  }
  func.func @transform_4(%arg0: i32) -> (i32, i32) {
    %c0_i32 = arith.constant 0 : i32
    %c0_i32_0 = arith.constant 0 : i32
    %c0_i32_1 = arith.constant 0 : i32
    return %c0_i32, %c0_i32_0 : i32, i32
  }
  func.func @transform_5(%arg0: i32) -> (i32, i32) {
    %c0_i32 = arith.constant 0 : i32
    %c0_i32_0 = arith.constant 0 : i32
    return %arg0, %c0_i32 : i32, i32
  }
}

</mosaic_0001>

<llo_original>
// kernel: tpu_custom_call.1
$region0: #{tpu_custom_call.1}
  #allocation0 [shape = 'u32[]', space=smem, size = 0x4, offset = 0x4, fixed_abs, tag = 'smem constant byte address 0x4 - core index']
  #allocation1 [shape = 'u32[144,128]{1,0:T(1,128)}', space=vmem, size = 0x12000, scoped, tag = 'internal scratch']
  %s0 = inlined_call_operand.vmem [shape: f32[256,15], index: 0, kind: input, shape index: {}]
  %s1 = inlined_call_operand.vmem [shape: f32[15,32], index: 1, kind: input, shape index: {}]
  %s2 = inlined_call_operand.vmem [shape: f32[16,256], index: 2, kind: input, shape index: {}]
  %s3 = inlined_call_operand.vmem [shape: f32[32,128], index: 3, kind: input, shape index: {}]
  %s4 = inlined_call_operand.vmem [shape: f32[1,128], index: 4, kind: input, shape index: {}]
  %s5 = inlined_call_operand.hbm [shape: f32[16,128], index: 5, kind: output, shape index: {}]
  %s6 = sld [smem:[#allocation0]]
  $region30: #{tpu_custom_call.1} parent=0
    _
  %s8 = ssub.s32 1, %s6
  %s9 = scalar_select 0, %s8, %s6
  $region1: #{tpu_custom_call.1} parent=0
    #allocation2 [shape = 'u8[8192]{0}', space=vmem, size = 0x2000, scoped, tag = 'output window, operand 0, single buffered']
    #allocation3 [shape = 's32[1]{0}', space=sflag, size = 0x4, scoped, tag = 'scoped memory for tpu_custom_call.1']
    %10 = vsyncpa [#allocation3], 0
    // Predicated region
    $region2: #{tpu_custom_call.1} parent=1 // pred_check
      _
    $region3: #{tpu_custom_call.1} parent=1 // pred_check_branch
      %12 = sbr.rel (0) target = $region5
    $region4: #{tpu_custom_call.1} parent=1 // pred_region
      _
    $region5: #{tpu_custom_call.1} parent=1 // pred_fallthru
      _
    // Predicated region
    $region6: #{tpu_custom_call.1} parent=1 // pred_check
      _
    $region7: #{tpu_custom_call.1} parent=1 // pred_check_branch
      %14 = sbr.rel (0) target = $region9
    $region8: #{tpu_custom_call.1} parent=1 // pred_region
      _
    $region9: #{tpu_custom_call.1} parent=1 // pred_fallthru
      _
    // Predicated region
    $region10: #{tpu_custom_call.1} parent=1 // pred_check
      _
    $region11: #{tpu_custom_call.1} parent=1 // pred_check_branch
      %16 = sbr.rel (0) target = $region13
    $region12: #{tpu_custom_call.1} parent=1 // pred_region
      _
    $region13: #{tpu_custom_call.1} parent=1 // pred_fallthru
      _
    // Predicated region
    $region14: #{tpu_custom_call.1} parent=1 // pred_check
      _
    $region15: #{tpu_custom_call.1} parent=1 // pred_check_branch
      %18 = sbr.rel (0) target = $region17
    $region16: #{tpu_custom_call.1} parent=1 // pred_region
      _
    $region17: #{tpu_custom_call.1} parent=1 // pred_fallthru
      _
    // Predicated region
    $region18: #{tpu_custom_call.1} parent=1 // pred_check
      _
    $region19: #{tpu_custom_call.1} parent=1 // pred_check_branch
      %20 = sbr.rel (0) target = $region21
    $region20: #{tpu_custom_call.1} parent=1 // pred_region
      _
    $region21: #{tpu_custom_call.1} parent=1 // pred_fallthru
      _
    %v21 = vld [vmem:[%s0] sm:$0xff]
    %v22 = vld [vmem:[%s0 + $0x8] sm:$0xff]
    %v23 = vld [vmem:[%s0 + $0x10] sm:$0xff]
    %v24 = vld [vmem:[%s0 + $0x18] sm:$0xff]
    %v25 = vld [vmem:[%s0 + $0x20] sm:$0xff]
    %v26 = vld [vmem:[%s0 + $0x28] sm:$0xff]
    %v27 = vld [vmem:[%s0 + $0x30] sm:$0xff]
    %v28 = vld [vmem:[%s0 + $0x38] sm:$0xff]
    %v29 = vld [vmem:[%s0 + $0x40] sm:$0xff]
    %v30 = vld [vmem:[%s0 + $0x48] sm:$0xff]
    %v31 = vld [vmem:[%s0 + $0x50] sm:$0xff]
    %v32 = vld [vmem:[%s0 + $0x58] sm:$0xff]
    %v33 = vld [vmem:[%s0 + $0x60] sm:$0xff]
    %v34 = vld [vmem:[%s0 + $0x68] sm:$0xff]
    %v35 = vld [vmem:[%s0 + $0x70] sm:$0xff]
    %v36 = vld [vmem:[%s0 + $0x78] sm:$0xff]
    %v37 = vld [vmem:[%s0 + $0x80] sm:$0xff]
    %v38 = vld [vmem:[%s0 + $0x88] sm:$0xff]
    %v39 = vld [vmem:[%s0 + $0x90] sm:$0xff]
    %v40 = vld [vmem:[%s0 + $0x98] sm:$0xff]
    %v41 = vld [vmem:[%s0 + $0xa0] sm:$0xff]
    %v42 = vld [vmem:[%s0 + $0xa8] sm:$0xff]
    %v43 = vld [vmem:[%s0 + $0xb0] sm:$0xff]
    %v44 = vld [vmem:[%s0 + $0xb8] sm:$0xff]
    %v45 = vld [vmem:[%s0 + $0xc0] sm:$0xff]
    %v46 = vld [vmem:[%s0 + $0xc8] sm:$0xff]
    %v47 = vld [vmem:[%s0 + $0xd0] sm:$0xff]
    %v48 = vld [vmem:[%s0 + $0xd8] sm:$0xff]
    %v49 = vld [vmem:[%s0 + $0xe0] sm:$0xff]
    %v50 = vld [vmem:[%s0 + $0xe8] sm:$0xff]
    %v51 = vld [vmem:[%s0 + $0xf0] sm:$0xff]
    %v52 = vld [vmem:[%s0 + $0xf8] sm:$0xff]
    %v53 = vld [vmem:[%s1] sm:$0xff]
    %v54 = vld [vmem:[%s1 + $0x8] sm:$0x7f]
    %vm55 = vcmask 121856
    %v57 = vsel %vm55, %v21, 0
    %v60 = vsel %vm55, %v22, 0
    %v63 = vsel %vm55, %v23, 0
    %v66 = vsel %vm55, %v24, 0
    %v69 = vsel %vm55, %v25, 0
    %v72 = vsel %vm55, %v26, 0
    %v75 = vsel %vm55, %v27, 0
    %v78 = vsel %vm55, %v28, 0
    %v81 = vsel %vm55, %v29, 0
    %v84 = vsel %vm55, %v30, 0
    %v87 = vsel %vm55, %v31, 0
    %v90 = vsel %vm55, %v32, 0
    %v93 = vsel %vm55, %v33, 0
    %v96 = vsel %vm55, %v34, 0
    %v99 = vsel %vm55, %v35, 0
    %v102 = vsel %vm55, %v36, 0
    %v105 = vsel %vm55, %v37, 0
    %v108 = vsel %vm55, %v38, 0
    %v111 = vsel %vm55, %v39, 0
    %v114 = vsel %vm55, %v40, 0
    %v117 = vsel %vm55, %v41, 0
    %v120 = vsel %vm55, %v42, 0
    %v123 = vsel %vm55, %v43, 0
    %v126 = vsel %vm55, %v44, 0
    %v129 = vsel %vm55, %v45, 0
    %v132 = vsel %vm55, %v46, 0
    %v135 = vsel %vm55, %v47, 0
    %v138 = vsel %vm55, %v48, 0
    %v141 = vsel %vm55, %v49, 0
    %v144 = vsel %vm55, %v50, 0
    %v147 = vsel %vm55, %v51, 0
    %v150 = vsel %vm55, %v52, 0
    %vm152 = vcmask 1046528
    %v154 = vsel %vm152, %v54, 0
    %156 = vmatprep.subr.mxu0 0.0
    %157 = vmatpush1.msra.mxu0 %v53
    %158 = vmatprep.subr.mxu0 0.0
    %159 = vmatpush1.msra.mxu0 %v154
    %160 = vmatprep.subr.mxu0 0.0
    %161 = vmatpush1.msra.mxu0 0.0
    %162 = vmatprep.subr.mxu0 0.0
    %163 = vmatpush1.msra.mxu0 0.0
    %164 = vmatprep.subr.mxu0 0.0
    %165 = vmatpush1.msra.mxu0 0.0
    %166 = vmatprep.subr.mxu0 0.0
    %167 = vmatpush1.msra.mxu0 0.0
    %168 = vmatprep.subr.mxu0 0.0
    %169 = vmatpush1.msra.mxu0 0.0
    %170 = vmatprep.subr.mxu0 0.0
    %171 = vmatpush1.msra.mxu0 0.0
    %172 = vmatprep.subr.mxu0 0.0
    %173 = vmatpush1.msra.mxu0 0.0
    %174 = vmatprep.subr.mxu0 0.0
    %175 = vmatpush1.msra.mxu0 0.0
    %176 = vmatprep.subr.mxu0 0.0
    %177 = vmatpush1.msra.mxu0 0.0
    %178 = vmatprep.subr.mxu0 0.0
    %179 = vmatpush1.msra.mxu0 0.0
    %180 = vmatprep.subr.mxu0 0.0
    %181 = vmatpush1.msra.mxu0 0.0
    %182 = vmatprep.subr.mxu0 0.0
    %183 = vmatpush1.msra.mxu0 0.0
    %184 = vmatprep.subr.mxu0 0.0
    %185 = vmatpush1.msra.mxu0 0.0
    %186 = vmatprep.subr.mxu0 0.0
    %187 = vmatpush1.msra.mxu0 0.0
    %188 = vmatprep.subr.mxu0 0.0
    %189 = vmatpush1.msra.mxu0 0.0
    %190 = vmatprep.subr.mxu0 0.0
    %191 = vmatpush1.msra.mxu0 0.0
    %192 = vmatprep.subr.mxu0 0.0
    %193 = vmatpush1.msra.mxu0 0.0
    %194 = vmatprep.subr.mxu0 0.0
    %195 = vmatpush1.msra.mxu0 0.0
    %196 = vmatprep.subr.mxu0 0.0
    %197 = vmatpush1.msra.mxu0 0.0
    %198 = vmatprep.subr.mxu0 0.0
    %199 = vmatpush1.msra.mxu0 0.0
    %200 = vmatprep.subr.mxu0 0.0
    %201 = vmatpush1.msra.mxu0 0.0
    %202 = vmatprep.subr.mxu0 0.0
    %203 = vmatpush1.msra.mxu0 0.0
    %204 = vmatprep.subr.mxu0 0.0
    %205 = vmatpush1.msra.mxu0 0.0
    %206 = vmatprep.subr.mxu0 0.0
    %207 = vmatpush1.msra.mxu0 0.0
    %208 = vmatprep.subr.mxu0 0.0
    %209 = vmatpush1.msra.mxu0 0.0
    %210 = vmatprep.subr.mxu0 0.0
    %211 = vmatpush1.msra.mxu0 0.0
    %212 = vmatprep.subr.mxu0 0.0
    %213 = vmatpush1.msra.mxu0 0.0
    %214 = vmatprep.subr.mxu0 0.0
    %215 = vmatpush1.msra.mxu0 0.0
    %216 = vmatprep.subr.mxu0 0.0
    %217 = vmatpush1.msra.mxu0 0.0
    %218 = vmatprep.subr.mxu0 0.0
    %219 = vmatpush1.msra.mxu0 0.0
    %220 = vmatprep.mubr.f32.mxu0 0.0
    %221 = vmatmul.mubr.f32.gmra.mrb[0].mxu0 %v57
    %v222 = vpop.f32.mrb[0].mxu0
    %v223 = vadd.f32 0.0, %v222
    %v224 = vpop.f32.mrb[0].mxu0
    %225 = vmatprep.mubr.f32.mxu0 0.0
    %226 = vmatmul.mubr.f32.gmra.mrb[0].mxu0 %v60
    %v227 = vpop.f32.mrb[0].mxu0
    %v228 = vadd.f32 0.0, %v227
    %v229 = vpop.f32.mrb[0].mxu0
    %230 = vmatprep.mubr.f32.mxu0 0.0
    %231 = vmatmul.mubr.f32.gmra.mrb[0].mxu0 %v63
    %v232 = vpop.f32.mrb[0].mxu0
    %v233 = vadd.f32 0.0, %v232
    %v234 = vpop.f32.mrb[0].mxu0
    %235 = vmatprep.mubr.f32.mxu0 0.0
    %236 = vmatmul.mubr.f32.gmra.mrb[0].mxu0 %v66
    %v237 = vpop.f32.mrb[0].mxu0
    %v238 = vadd.f32 0.0, %v237
    %v239 = vpop.f32.mrb[0].mxu0
    %240 = vmatprep.mubr.f32.mxu0 0.0
    %241 = vmatmul.mubr.f32.gmra.mrb[0].mxu0 %v69
    %v242 = vpop.f32.mrb[0].mxu0
    %v243 = vadd.f32 0.0, %v242
    %v244 = vpop.f32.mrb[0].mxu0
    %245 = vmatprep.mubr.f32.mxu0 0.0
    %246 = vmatmul.mubr.f32.gmra.mrb[0].mxu0 %v72
    %v247 = vpop.f32.mrb[0].mxu0
    %v248 = vadd.f32 0.0, %v247
    %v249 = vpop.f32.mrb[0].mxu0
    %250 = vmatprep.mubr.f32.mxu0 0.0
    %251 = vmatmul.mubr.f32.gmra.mrb[0].mxu0 %v75
    %v252 = vpop.f32.mrb[0].mxu0
    %v253 = vadd.f32 0.0, %v252
    %v254 = vpop.f32.mrb[0].mxu0
    %255 = vmatprep.mubr.f32.mxu0 0.0
    %256 = vmatmul.mubr.f32.gmra.mrb[0].mxu0 %v78
    %v257 = vpop.f32.mrb[0].mxu0
    %v258 = vadd.f32 0.0, %v257
    %v259 = vpop.f32.mrb[0].mxu0
    %260 = vmatprep.mubr.f32.mxu0 0.0
    %261 = vmatmul.mubr.f32.gmra.mrb[0].mxu0 %v81
    %v262 = vpop.f32.mrb[0].mxu0
    %v263 = vadd.f32 0.0, %v262
    %v264 = vpop.f32.mrb[0].mxu0
    %265 = vmatprep.mubr.f32.mxu0 0.0
    %266 = vmatmul.mubr.f32.gmra.mrb[0].mxu0 %v84
    %v267 = vpop.f32.mrb[0].mxu0
    %v268 = vadd.f32 0.0, %v267
    %v269 = vpop.f32.mrb[0].mxu0
    %270 = vmatprep.mubr.f32.mxu0 0.0
    %271 = vmatmul.mubr.f32.gmra.mrb[0].mxu0 %v87
    %v272 = vpop.f32.mrb[0].mxu0
    %v273 = vadd.f32 0.0, %v272
    %v274 = vpop.f32.mrb[0].mxu0
    %275 = vmatprep.mubr.f32.mxu0 0.0
    %276 = vmatmul.mubr.f32.gmra.mrb[0].mxu0 %v90
    %v277 = vpop.f32.mrb[0].mxu0
    %v278 = vadd.f32 0.0, %v277
    %v279 = vpop.f32.mrb[0].mxu0
    %280 = vmatprep.mubr.f32.mxu0 0.0
    %281 = vmatmul.mubr.f32.gmra.mrb[0].mxu0 %v93
    %v282 = vpop.f32.mrb[0].mxu0
    %v283 = vadd.f32 0.0, %v282
    %v284 = vpop.f32.mrb[0].mxu0
    %285 = vmatprep.mubr.f32.mxu0 0.0
    %286 = vmatmul.mubr.f32.gmra.mrb[0].mxu0 %v96
    %v287 = vpop.f32.mrb[0].mxu0
    %v288 = vadd.f32 0.0, %v287
    %v289 = vpop.f32.mrb[0].mxu0
    %290 = vmatprep.mubr.f32.mxu0 0.0
    %291 = vmatmul.mubr.f32.gmra.mrb[0].mxu0 %v99
    %v292 = vpop.f32.mrb[0].mxu0
    %v293 = vadd.f32 0.0, %v292
    %v294 = vpop.f32.mrb[0].mxu0
    %295 = vmatprep.mubr.f32.mxu0 0.0
    %296 = vmatmul.mubr.f32.gmra.mrb[0].mxu0 %v102
    %v297 = vpop.f32.mrb[0].mxu0
    %v298 = vadd.f32 0.0, %v297
    %v299 = vpop.f32.mrb[0].mxu0
    %300 = vmatprep.mubr.f32.mxu0 0.0
    %301 = vmatmul.mubr.f32.gmra.mrb[0].mxu0 %v105
    %v302 = vpop.f32.mrb[0].mxu0
    %v303 = vadd.f32 0.0, %v302
    %v304 = vpop.f32.mrb[0].mxu0
    %305 = vmatprep.mubr.f32.mxu0 0.0
    %306 = vmatmul.mubr.f32.gmra.mrb[0].mxu0 %v108
    %v307 = vpop.f32.mrb[0].mxu0
    %v308 = vadd.f32 0.0, %v307
    %v309 = vpop.f32.mrb[0].mxu0
    %310 = vmatprep.mubr.f32.mxu0 0.0
    %311 = vmatmul.mubr.f32.gmra.mrb[0].mxu0 %v111
    %v312 = vpop.f32.mrb[0].mxu0
    %v313 = vadd.f32 0.0, %v312
    %v314 = vpop.f32.mrb[0].mxu0
    %315 = vmatprep.mubr.f32.mxu0 0.0
    %316 = vmatmul.mubr.f32.gmra.mrb[0].mxu0 %v114
    %v317 = vpop.f32.mrb[0].mxu0
    %v318 = vadd.f32 0.0, %v317
    %v319 = vpop.f32.mrb[0].mxu0
    %320 = vmatprep.mubr.f32.mxu0 0.0
    %321 = vmatmul.mubr.f32.gmra.mrb[0].mxu0 %v117
    %v322 = vpop.f32.mrb[0].mxu0
    %v323 = vadd.f32 0.0, %v322
    %v324 = vpop.f32.mrb[0].mxu0
    %325 = vmatprep.mubr.f32.mxu0 0.0
    %326 = vmatmul.mubr.f32.gmra.mrb[0].mxu0 %v120
    %v327 = vpop.f32.mrb[0].mxu0
    %v328 = vadd.f32 0.0, %v327
    %v329 = vpop.f32.mrb[0].mxu0
    %330 = vmatprep.mubr.f32.mxu0 0.0
    %331 = vmatmul.mubr.f32.gmra.mrb[0].mxu0 %v123
    %v332 = vpop.f32.mrb[0].mxu0
    %v333 = vadd.f32 0.0, %v332
    %v334 = vpop.f32.mrb[0].mxu0
    %335 = vmatprep.mubr.f32.mxu0 0.0
    %336 = vmatmul.mubr.f32.gmra.mrb[0].mxu0 %v126
    %v337 = vpop.f32.mrb[0].mxu0
    %v338 = vadd.f32 0.0, %v337
    %v339 = vpop.f32.mrb[0].mxu0
    %340 = vmatprep.mubr.f32.mxu0 0.0
    %341 = vmatmul.mubr.f32.gmra.mrb[0].mxu0 %v129
    %v342 = vpop.f32.mrb[0].mxu0
    %v343 = vadd.f32 0.0, %v342
    %v344 = vpop.f32.mrb[0].mxu0
    %345 = vmatprep.mubr.f32.mxu0 0.0
    %346 = vmatmul.mubr.f32.gmra.mrb[0].mxu0 %v132
    %v347 = vpop.f32.mrb[0].mxu0
    %v348 = vadd.f32 0.0, %v347
    %v349 = vpop.f32.mrb[0].mxu0
    %350 = vmatprep.mubr.f32.mxu0 0.0
    %351 = vmatmul.mubr.f32.gmra.mrb[0].mxu0 %v135
    %v352 = vpop.f32.mrb[0].mxu0
    %v353 = vadd.f32 0.0, %v352
    %v354 = vpop.f32.mrb[0].mxu0
    %355 = vmatprep.mubr.f32.mxu0 0.0
    %356 = vmatmul.mubr.f32.gmra.mrb[0].mxu0 %v138
    %v357 = vpop.f32.mrb[0].mxu0
    %v358 = vadd.f32 0.0, %v357
    %v359 = vpop.f32.mrb[0].mxu0
    %360 = vmatprep.mubr.f32.mxu0 0.0
    %361 = vmatmul.mubr.f32.gmra.mrb[0].mxu0 %v141
    %v362 = vpop.f32.mrb[0].mxu0
    %v363 = vadd.f32 0.0, %v362
    %v364 = vpop.f32.mrb[0].mxu0
    %365 = vmatprep.mubr.f32.mxu0 0.0
    %366 = vmatmul.mubr.f32.gmra.mrb[0].mxu0 %v144
    %v367 = vpop.f32.mrb[0].mxu0
    %v368 = vadd.f32 0.0, %v367
    %v369 = vpop.f32.mrb[0].mxu0
    %370 = vmatprep.mubr.f32.mxu0 0.0
    %371 = vmatmul.mubr.f32.gmra.mrb[0].mxu0 %v147
    %v372 = vpop.f32.mrb[0].mxu0
    %v373 = vadd.f32 0.0, %v372
    %v374 = vpop.f32.mrb[0].mxu0
    %375 = vmatprep.mubr.f32.mxu0 0.0
    %376 = vmatmul.mubr.f32.gmra.mrb[0].mxu0 %v150
    %v377 = vpop.f32.mrb[0].mxu0
    %v378 = vadd.f32 0.0, %v377
    %v379 = vpop.f32.mrb[0].mxu0
    %380 = vdwg.mxu0
    %v381 = vmax.f32 %v223, 0.0
    %v382 = vmax.f32 %v228, 0.0
    %v383 = vmax.f32 %v233, 0.0
    %v384 = vmax.f32 %v238, 0.0
    %v385 = vmax.f32 %v243, 0.0
    %v386 = vmax.f32 %v248, 0.0
    %v387 = vmax.f32 %v253, 0.0
    %v388 = vmax.f32 %v258, 0.0
    %v389 = vmax.f32 %v263, 0.0
    %v390 = vmax.f32 %v268, 0.0
    %v391 = vmax.f32 %v273, 0.0
    %v392 = vmax.f32 %v278, 0.0
    %v393 = vmax.f32 %v283, 0.0
    %v394 = vmax.f32 %v288, 0.0
    %v395 = vmax.f32 %v293, 0.0
    %v396 = vmax.f32 %v298, 0.0
    %v397 = vmax.f32 %v303, 0.0
    %v398 = vmax.f32 %v308, 0.0
    %v399 = vmax.f32 %v313, 0.0
    %v400 = vmax.f32 %v318, 0.0
    %v401 = vmax.f32 %v323, 0.0
    %v402 = vmax.f32 %v328, 0.0
    %v403 = vmax.f32 %v333, 0.0
    %v404 = vmax.f32 %v338, 0.0
    %v405 = vmax.f32 %v343, 0.0
    %v406 = vmax.f32 %v348, 0.0
    %v407 = vmax.f32 %v353, 0.0
    %v408 = vmax.f32 %v358, 0.0
    %v409 = vmax.f32 %v363, 0.0
    %v410 = vmax.f32 %v368, 0.0
    %v411 = vmax.f32 %v373, 0.0
    %v412 = vmax.f32 %v378, 0.0
    %v413 = vld [vmem:[%s2] sm:$0xff]
    %v414 = vld [vmem:[%s2 + $0x8] sm:$0xff]
    %v415 = vld [vmem:[%s2 + $0x10] sm:$0xff]
    %v416 = vld [vmem:[%s2 + $0x18] sm:$0xff]
    %417 = vmatprep.subr.mxu0 0.0
    %418 = vmatpush1.msra.mxu0 %v381
    %419 = vmatprep.subr.mxu0 0.0
    %420 = vmatpush1.msra.mxu0 %v382
    %421 = vmatprep.subr.mxu0 0.0
    %422 = vmatpush1.msra.mxu0 %v383
    %423 = vmatprep.subr.mxu0 0.0
    %424 = vmatpush1.msra.mxu0 %v384
    %425 = vmatprep.subr.mxu0 0.0
    %426 = vmatpush1.msra.mxu0 %v385
    %427 = vmatprep.subr.mxu0 0.0
    %428 = vmatpush1.msra.mxu0 %v386
    %429 = vmatprep.subr.mxu0 0.0
    %430 = vmatpush1.msra.mxu0 %v387
    %431 = vmatprep.subr.mxu0 0.0
    %432 = vmatpush1.msra.mxu0 %v388
    %433 = vmatprep.subr.mxu0 0.0
    %434 = vmatpush1.msra.mxu0 %v389
    %435 = vmatprep.subr.mxu0 0.0
    %436 = vmatpush1.msra.mxu0 %v390
    %437 = vmatprep.subr.mxu0 0.0
    %438 = vmatpush1.msra.mxu0 %v391
    %439 = vmatprep.subr.mxu0 0.0
    %440 = vmatpush1.msra.mxu0 %v392
    %441 = vmatprep.subr.mxu0 0.0
    %442 = vmatpush1.msra.mxu0 %v393
    %443 = vmatprep.subr.mxu0 0.0
    %444 = vmatpush1.msra.mxu0 %v394
    %445 = vmatprep.subr.mxu0 0.0
    %446 = vmatpush1.msra.mxu0 %v395
    %447 = vmatprep.subr.mxu0 0.0
    %448 = vmatpush1.msra.mxu0 %v396
    %449 = vmatprep.subr.mxu0 0.0
    %450 = vmatpush1.msra.mxu0 %v397
    %451 = vmatprep.subr.mxu0 0.0
    %452 = vmatpush1.msra.mxu0 %v398
    %453 = vmatprep.subr.mxu0 0.0
    %454 = vmatpush1.msra.mxu0 %v399
    %455 = vmatprep.subr.mxu0 0.0
    %456 = vmatpush1.msra.mxu0 %v400
    %457 = vmatprep.subr.mxu0 0.0
    %458 = vmatpush1.msra.mxu0 %v401
    %459 = vmatprep.subr.mxu0 0.0
    %460 = vmatpush1.msra.mxu0 %v402
    %461 = vmatprep.subr.mxu0 0.0
    %462 = vmatpush1.msra.mxu0 %v403
    %463 = vmatprep.subr.mxu0 0.0
    %464 = vmatpush1.msra.mxu0 %v404
    %465 = vmatprep.subr.mxu0 0.0
    %466 = vmatpush1.msra.mxu0 %v405
    %467 = vmatprep.subr.mxu0 0.0
    %468 = vmatpush1.msra.mxu0 %v406
    %469 = vmatprep.subr.mxu0 0.0
    %470 = vmatpush1.msra.mxu0 %v407
    %471 = vmatprep.subr.mxu0 0.0
    %472 = vmatpush1.msra.mxu0 %v408
    %473 = vmatprep.subr.mxu0 0.0
    %474 = vmatpush1.msra.mxu0 %v409
    %475 = vmatprep.subr.mxu0 0.0
    %476 = vmatpush1.msra.mxu0 %v410
    %477 = vmatprep.subr.mxu0 0.0
    %478 = vmatpush1.msra.mxu0 %v411
    %479 = vmatprep.subr.mxu0 0.0
    %480 = vmatpush1.msra.mxu0 %v412
    %481 = vmatprep.mubr.f32.mxu0 %v414
    %482 = vmatmul.mubr.f32.gmra.mrb[0].mxu0 %v413
    %v483 = vpop.f32.mrb[0].mxu0
    %v484 = vadd.f32 0.0, %v483
    %v485 = vpop.f32.mrb[0].mxu0
    %486 = vmatprep.mubr.f32.mxu0 %v416
    %487 = vmatmul.mubr.f32.gmra.mrb[0].mxu0 %v415
    %v488 = vpop.f32.mrb[0].mxu0
    %v489 = vadd.f32 0.0, %v488
    %v490 = vpop.f32.mrb[0].mxu0
    %491 = vdwg.mxu0
    %v492 = vld [vmem:[%s3] sm:$0xff]
    %v493 = vld [vmem:[%s3 + $0x8] sm:$0xff]
    %v494 = vld [vmem:[%s3 + $0x10] sm:$0xff]
    %v495 = vld [vmem:[%s3 + $0x18] sm:$0xff]
    %v496 = vld [vmem:[%s4] sm:$0x1]
    %v498 = vlaneseq
    %v499 = vshrl.u32 %v498, 7
    %v500 = vsub.s32 0, %v499
    %v501 = vrot.slane %v496, %v500
    %vm503 = vcmask 261120
    %v505 = vsel %vm503, %v484, 0
    %v508 = vsel %vm503, %v489, 0
    %510 = vmatprep.subr.mxu0 0.0
    %511 = vmatpush1.msra.mxu0 %v492
    %512 = vmatprep.subr.mxu0 0.0
    %513 = vmatpush1.msra.mxu0 %v493
    %514 = vmatprep.subr.mxu0 0.0
    %515 = vmatpush1.msra.mxu0 %v494
    %516 = vmatprep.subr.mxu0 0.0
    %517 = vmatpush1.msra.mxu0 %v495
    %518 = vmatprep.subr.mxu0 0.0
    %519 = vmatpush1.msra.mxu0 0.0
    %520 = vmatprep.subr.mxu0 0.0
    %521 = vmatpush1.msra.mxu0 0.0
    %522 = vmatprep.subr.mxu0 0.0
    %523 = vmatpush1.msra.mxu0 0.0
    %524 = vmatprep.subr.mxu0 0.0
    %525 = vmatpush1.msra.mxu0 0.0
    %526 = vmatprep.subr.mxu0 0.0
    %527 = vmatpush1.msra.mxu0 0.0
    %528 = vmatprep.subr.mxu0 0.0
    %529 = vmatpush1.msra.mxu0 0.0
    %530 = vmatprep.subr.mxu0 0.0
    %531 = vmatpush1.msra.mxu0 0.0
    %532 = vmatprep.subr.mxu0 0.0
    %533 = vmatpush1.msra.mxu0 0.0
    %534 = vmatprep.subr.mxu0 0.0
    %535 = vmatpush1.msra.mxu0 0.0
    %536 = vmatprep.subr.mxu0 0.0
    %537 = vmatpush1.msra.mxu0 0.0
    %538 = vmatprep.subr.mxu0 0.0
    %539 = vmatpush1.msra.mxu0 0.0
    %540 = vmatprep.subr.mxu0 0.0
    %541 = vmatpush1.msra.mxu0 0.0
    %542 = vmatprep.subr.mxu0 0.0
    %543 = vmatpush1.msra.mxu0 0.0
    %544 = vmatprep.subr.mxu0 0.0
    %545 = vmatpush1.msra.mxu0 0.0
    %546 = vmatprep.subr.mxu0 0.0
    %547 = vmatpush1.msra.mxu0 0.0
    %548 = vmatprep.subr.mxu0 0.0
    %549 = vmatpush1.msra.mxu0 0.0
    %550 = vmatprep.subr.mxu0 0.0
    %551 = vmatpush1.msra.mxu0 0.0
    %552 = vmatprep.subr.mxu0 0.0
    %553 = vmatpush1.msra.mxu0 0.0
    %554 = vmatprep.subr.mxu0 0.0
    %555 = vmatpush1.msra.mxu0 0.0
    %556 = vmatprep.subr.mxu0 0.0
    %557 = vmatpush1.msra.mxu0 0.0
    %558 = vmatprep.subr.mxu0 0.0
    %559 = vmatpush1.msra.mxu0 0.0
    %560 = vmatprep.subr.mxu0 0.0
    %561 = vmatpush1.msra.mxu0 0.0
    %562 = vmatprep.subr.mxu0 0.0
    %563 = vmatpush1.msra.mxu0 0.0
    %564 = vmatprep.subr.mxu0 0.0
    %565 = vmatpush1.msra.mxu0 0.0
    %566 = vmatprep.subr.mxu0 0.0
    %567 = vmatpush1.msra.mxu0 0.0
    %568 = vmatprep.subr.mxu0 0.0
    %569 = vmatpush1.msra.mxu0 0.0
    %570 = vmatprep.subr.mxu0 0.0
    %571 = vmatpush1.msra.mxu0 0.0
    %572 = vmatprep.subr.mxu0 0.0
    %573 = vmatpush1.msra.mxu0 0.0
    %574 = vmatprep.mubr.f32.mxu0 0.0
    %575 = vmatmul.mubr.f32.gmra.mrb[0].mxu0 %v505
    %v576 = vpop.f32.mrb[0].mxu0
    %v577 = vadd.f32 %v501, %v576
    %v578 = vpop.f32.mrb[0].mxu0
    %579 = vmatprep.mubr.f32.mxu0 0.0
    %580 = vmatmul.mubr.f32.gmra.mrb[0].mxu0 %v508
    %v581 = vpop.f32.mrb[0].mxu0
    %v582 = vadd.f32 %v501, %v581
    %v583 = vpop.f32.mrb[0].mxu0
    %584 = vdwg.mxu0
    %585 = vst [vmem:[#allocation2] sm:$0xff] %v577
    %586 = vst [vmem:[#allocation2 + $0x8] sm:$0xff] %v582
    // Predicated region
    $region22: #{tpu_custom_call.1} parent=1 // pred_check
      _
    $region23: #{tpu_custom_call.1} parent=1 // pred_check_branch
      %588 = sbr.rel (0) target = $region25
    $region24: #{tpu_custom_call.1} parent=1 // pred_region
      %s590 = ssub.s32 256, 256
      %591 = vsyncadd [#allocation3], %s590
      %s592 = sshll.u32 [#allocation2], 4
      %s593 = int_to_ptr.vmem [resolvable:$true] %s592
      %598 = dma.vmem_to_hbm [thread:$0]  %s593, 256, %s5, [#allocation3], 128, 128, 8
    $region25: #{tpu_custom_call.1} parent=1 // pred_fallthru
      _
    // Predicated region
    $region26: #{tpu_custom_call.1} parent=1 // pred_check
      _
    $region27: #{tpu_custom_call.1} parent=1 // pred_check_branch
      %600 = sbr.rel (0) target = $region29
    $region28: #{tpu_custom_call.1} parent=1 // pred_region
      %601 = dma.done [#allocation3], 256
    $region29: #{tpu_custom_call.1} parent=1 // pred_fallthru
      _
    %602 = vsyncpa [#allocation3], 1

</llo_original>
